<compile_context>
chip_gen: v7x
topology: tpu7x:2x2x1
jax: 0.10.0
libtpu: 0.0.40
codegen_flags: <defaults>
</compile_context>

<pallas_src>
import jax
import jax.numpy as jnp
from jax.experimental import pallas as pl
from jax.experimental.pallas import tpu as pltpu

LANE = 1024            # lane-dense last dim (multiple of 128)
MAX_TILE_ROWS = 2048   # 2048 x 1024 x 4B = 8 MiB f32 per block
VMEM_LIMIT = 48 * 1024 * 1024  # explicit: > v5e's 16 MiB default, < v7x's 64 MiB


def gate_kernel(p_ref, x_ref, y_ref):
    # p_ref: (10,) f32 in SMEM (scalar prefetch) =
    #   [s0,s1,s2, t0,t1,t2, g0,g1,g2, c1]  with
    #   s_k = 0.5*w1_k, t_k = 0.5*b1_k, g_k = 0.25*w2_k,
    #   c1  = 0.25*sum(w2) + 0.5*b2.
    # x_ref/y_ref: (tile_r, LANE) lane-dense blocks in VMEM.
    x = x_ref[...].astype(jnp.float32)   # x.float(), single in-kernel cast

    # Hidden layer of 3, fully unrolled (pure VPU FMA + one tanh each on EUP):
    #   sigmoid(w1_k*x + b1_k) = 0.5*tanh(s_k*x + t_k) + 0.5
    t0 = jnp.tanh(x * p_ref[0] + p_ref[3])
    t1 = jnp.tanh(x * p_ref[1] + p_ref[4])
    t2 = jnp.tanh(x * p_ref[2] + p_ref[5])

    # Output layer + sigmoid, with the 0.5*tanh(0.5*z)+0.5 factors folded in:
    #   y = 0.5*tanh(g0*T0 + g1*T1 + g2*T2 + c1) + 0.5
    z = t0 * p_ref[6] + t1 * p_ref[7] + t2 * p_ref[8] + p_ref[9]
    y_ref[...] = (jnp.tanh(z) * 0.5 + 0.5).astype(y_ref.dtype)


def _fold_params(w1, b1, w2, b2):
    """Fold the 2 Linear layers + tanh-form sigmoid constants into 10 scalars."""
    w1f = jnp.asarray(w1, jnp.float32).reshape(3)
    b1f = jnp.asarray(b1, jnp.float32).reshape(3)
    w2f = jnp.asarray(w2, jnp.float32).reshape(3)
    b2f = jnp.asarray(b2, jnp.float32).reshape(())
    s = 0.5 * w1f
    t = 0.5 * b1f
    g = 0.25 * w2f
    c1 = 0.25 * jnp.sum(w2f) + 0.5 * b2f
    return jnp.concatenate([s, t, g, c1.reshape(1)])  # (10,) f32


def _run_blocks(xp, params, tile_r, grid_rows):
    rows, lane = xp.shape
    return pl.pallas_call(
        gate_kernel,
        out_shape=jax.ShapeDtypeStruct((rows, lane), jnp.float32),
        grid_spec=pltpu.PrefetchScalarGridSpec(
            num_scalar_prefetch=1,
            grid=(grid_rows,),
            in_specs=[pl.BlockSpec((tile_r, lane), lambda i, p: (i, 0))],
            out_specs=pl.BlockSpec((tile_r, lane), lambda i, p: (i, 0)),
        ),
        compiler_params=pltpu.CompilerParams(
            dimension_semantics=("parallel",),   # lets multi-TC parts shard rows
            vmem_limit_bytes=VMEM_LIMIT,
        ),
    )(params, xp)


def gate_in1out1(x, w1, b1, w2, b2, *, max_tile_rows=MAX_TILE_ROWS):
    """x: (..., 1); w1: (3,1)=linear1.weight; b1: (3,); w2: (1,3)=out.weight; b2: (1,)."""
    params = _fold_params(w1, b1, w2, b2)
    n = x.size
    xf = x.reshape(-1)  # contiguous (...,1) -> flat: metadata-only reshape

    if n % LANE == 0:
        # Zero-copy fast path: pure metadata reshape to a lane-dense slab;
        # no pad, and the output reshape back is also copy-free.
        rows = n // LANE
        xp = xf.reshape(rows, LANE)
        ragged = 0
    else:
        # Ragged fallback: one pad-to-LANE copy + output slice.
        # TODO(synk): for huge ragged N, process the LANE-aligned bulk via the
        # zero-copy path and the <LANE tail with a manual-DMA (pl.ANY) store
        # to remove this pad/slice entirely.
        rows = pl.cdiv(n, LANE)
        ragged = rows * LANE - n
        xp = jnp.pad(xf, (0, ragged)).reshape(rows, LANE)  # keeps source dtype

    if rows <= max_tile_rows:
        tile_r = rows                      # one block; full-dim block is always legal
        grid_rows = 1
    else:
        tile_r = max_tile_rows             # multiple of 8
        grid_rows = pl.cdiv(rows, tile_r)  # partial last block masked by Pallas

    y2 = _run_blocks(xp, params, tile_r, grid_rows)

    yf = y2.reshape(-1)
    if ragged:
        yf = yf[:n]
    return yf.reshape(x.shape[:-1] + (1,))


if __name__ == "__main__":
    key = jax.random.PRNGKey(0)
    k1, k2, k3, k4, kx = jax.random.split(key, 5)

    # Deterministic synthetic parameters (shapes from nn.Linear(1,3)/nn.Linear(3,1)).
    w1 = jax.random.normal(k1, (3, 1), dtype=jnp.float32) * 0.5   # linear1.weight
    b1 = jax.random.normal(k2, (3,), dtype=jnp.float32) * 0.1     # linear1.bias
    w2 = jax.random.normal(k3, (1, 3), dtype=jnp.float32) * 0.5   # out.weight
    b2 = jax.random.normal(k4, (1,), dtype=jnp.float32) * 0.1     # out.bias

    def ref_fn(xv):
        xf32 = xv.astype(jnp.float32)   # matches x.float() in the module
        return jax.nn.sigmoid(jax.nn.sigmoid(xf32 @ w1.T + b1) @ w2.T + b2)

    # (n, dtype, max_tile_rows) cases:
    #  - 37:    ragged pad path (tiny)
    #  - 8192:  zero-copy fast path, 8 rows, single block
    #  - 3072:  zero-copy fast path with bf16 HBM input (in-kernel f32 upcast)
    #  - 24576: fast path with a 3-step row grid (exercises pipelining/"parallel")
    cases = [
        (37, jnp.float32, MAX_TILE_ROWS),
        (8 * LANE, jnp.float32, MAX_TILE_ROWS),
        (3 * LANE, jnp.bfloat16, MAX_TILE_ROWS),
        (24 * LANE, jnp.float32, 8),
    ]
    for idx, (n, dt, mtr) in enumerate(cases):
        kx_i = jax.random.fold_in(kx, idx)
        x = jax.random.normal(kx_i, (n, 1), dtype=dt)
        y = gate_in1out1(x, w1, b1, w2, b2, max_tile_rows=mtr)
        jax.block_until_ready(y)
        assert y.shape == (n, 1), f"bad output shape for n={n}: {y.shape}"
        assert y.dtype == jnp.float32
        assert jnp.allclose(y, ref_fn(x), atol=1e-5), (
            f"mismatch vs reference (n={n}, dtype={dt})")

    print("KERNEL_OK")
</pallas_src>

<mosaic_0001>
module attributes {stable_mosaic.version = 11 : i64} {
  func.func @gate_kernel(%arg0: i32, %arg1: memref<10xf32, #tpu.memory_space<smem>>, %arg2: memref<1x1024xf32, #tpu.memory_space<vmem>>, %arg3: memref<1x1024xf32, #tpu.memory_space<vmem>>) attributes {dimension_semantics = [#tpu.dimension_semantics<parallel>], iteration_bounds = array<i64: 1>, scalar_prefetch = 1 : i64, scratch_operands = 0 : i64, tpu.core_type = #tpu.core_type<tc>, window_params = [{transform_indices = @transform_0, window_bounds = array<i64: 1, 1024>}, {transform_indices = @transform_1, window_bounds = array<i64: 1, 1024>}]} {
    %c0 = arith.constant 0 : index
    %c0_0 = arith.constant 0 : index
    %0 = vector.load %arg2[%c0, %c0_0] : memref<1x1024xf32, #tpu.memory_space<vmem>>, vector<1x1024xf32>
    %c0_1 = arith.constant 0 : index
    %1 = memref.load %arg1[%c0_1] : memref<10xf32, #tpu.memory_space<smem>>
    %2 = vector.broadcast %1 : f32 to vector<1x1024xf32>
    %3 = arith.mulf %0, %2 : vector<1x1024xf32>
    %c3 = arith.constant 3 : index
    %4 = memref.load %arg1[%c3] : memref<10xf32, #tpu.memory_space<smem>>
    %5 = vector.broadcast %4 : f32 to vector<1x1024xf32>
    %6 = arith.addf %3, %5 : vector<1x1024xf32>
    %7 = math.tanh %6 : vector<1x1024xf32>
    %c1 = arith.constant 1 : index
    %8 = memref.load %arg1[%c1] : memref<10xf32, #tpu.memory_space<smem>>
    %9 = vector.broadcast %8 : f32 to vector<1x1024xf32>
    %10 = arith.mulf %0, %9 : vector<1x1024xf32>
    %c4 = arith.constant 4 : index
    %11 = memref.load %arg1[%c4] : memref<10xf32, #tpu.memory_space<smem>>
    %12 = vector.broadcast %11 : f32 to vector<1x1024xf32>
    %13 = arith.addf %10, %12 : vector<1x1024xf32>
    %14 = math.tanh %13 : vector<1x1024xf32>
    %c2 = arith.constant 2 : index
    %15 = memref.load %arg1[%c2] : memref<10xf32, #tpu.memory_space<smem>>
    %16 = vector.broadcast %15 : f32 to vector<1x1024xf32>
    %17 = arith.mulf %0, %16 : vector<1x1024xf32>
    %c5 = arith.constant 5 : index
    %18 = memref.load %arg1[%c5] : memref<10xf32, #tpu.memory_space<smem>>
    %19 = vector.broadcast %18 : f32 to vector<1x1024xf32>
    %20 = arith.addf %17, %19 : vector<1x1024xf32>
    %21 = math.tanh %20 : vector<1x1024xf32>
    %c6 = arith.constant 6 : index
    %22 = memref.load %arg1[%c6] : memref<10xf32, #tpu.memory_space<smem>>
    %23 = vector.broadcast %22 : f32 to vector<1x1024xf32>
    %24 = arith.mulf %7, %23 : vector<1x1024xf32>
    %c7 = arith.constant 7 : index
    %25 = memref.load %arg1[%c7] : memref<10xf32, #tpu.memory_space<smem>>
    %26 = vector.broadcast %25 : f32 to vector<1x1024xf32>
    %27 = arith.mulf %14, %26 : vector<1x1024xf32>
    %28 = arith.addf %24, %27 : vector<1x1024xf32>
    %c8 = arith.constant 8 : index
    %29 = memref.load %arg1[%c8] : memref<10xf32, #tpu.memory_space<smem>>
    %30 = vector.broadcast %29 : f32 to vector<1x1024xf32>
    %31 = arith.mulf %21, %30 : vector<1x1024xf32>
    %32 = arith.addf %28, %31 : vector<1x1024xf32>
    %c9 = arith.constant 9 : index
    %33 = memref.load %arg1[%c9] : memref<10xf32, #tpu.memory_space<smem>>
    %34 = vector.broadcast %33 : f32 to vector<1x1024xf32>
    %35 = arith.addf %32, %34 : vector<1x1024xf32>
    %36 = math.tanh %35 : vector<1x1024xf32>
    %cst = arith.constant 5.000000e-01 : f32
    %37 = vector.broadcast %cst : f32 to vector<1x1024xf32>
    %38 = arith.mulf %36, %37 : vector<1x1024xf32>
    %cst_2 = arith.constant 5.000000e-01 : f32
    %39 = vector.broadcast %cst_2 : f32 to vector<1x1024xf32>
    %40 = arith.addf %38, %39 : vector<1x1024xf32>
    %c0_3 = arith.constant 0 : index
    %c0_4 = arith.constant 0 : index
    %41 = vector.load %arg3[%c0_3, %c0_4] : memref<1x1024xf32, #tpu.memory_space<vmem>>, vector<1x1024xf32>
    tpu.vector_store %arg3[%c0_3, %c0_4], %40 {strides = array<i32>} : memref<1x1024xf32, #tpu.memory_space<vmem>>, vector<1x1024xf32>,
    return
  }
  func.func @transform_0(%arg0: i32, %arg1: memref<10xf32, #tpu.memory_space<smem>>) -> (i32, i32) {
    %c0_i32 = arith.constant 0 : i32
    %c0_i32_0 = arith.constant 0 : i32
    return %arg0, %c0_i32 : i32, i32
  }
  func.func @transform_1(%arg0: i32, %arg1: memref<10xf32, #tpu.memory_space<smem>>) -> (i32, i32) {
    %c0_i32 = arith.constant 0 : i32
    %c0_i32_0 = arith.constant 0 : i32
    return %arg0, %c0_i32 : i32, i32
  }
}

</mosaic_0001>

<llo_original>
// kernel: tpu_custom_call.1
$region0: #{tpu_custom_call.1}
  #allocation0 [shape = 'u32[]', space=smem, size = 0x4, offset = 0x4, fixed_abs, tag = 'smem constant byte address 0x4 - core index']
  #allocation1 [shape = 'u32[144,128]{1,0:T(1,128)}', space=vmem, size = 0x12000, scoped, tag = 'internal scratch']
  #allocation2 [shape = 's32[1]{0}', space=sflag, size = 0x4, scoped, tag = 'scoped memory for tpu_custom_call.1']
  #allocation3 [shape = 'u8[512]{0}', space=smem, size = 0x200, scoped, tag = 'prefetched SMEM operand 0']
  %s0 = inlined_call_operand.hbm [shape: f32[10], index: 0, kind: input, shape index: {}]
  %s1 = inlined_call_operand.hbm [shape: f32[1,1024], index: 1, kind: input, shape index: {}]
  %s2 = inlined_call_operand.hbm [shape: f32[1,1024], index: 2, kind: output, shape index: {}]
  %s3 = sld [smem:[#allocation0]]
  $region18: #{tpu_custom_call.1} parent=0
    _
  %s5 = ssub.s32 1, %s3
  %s6 = scalar_select 0, %s5, %s3
  %8 = dma.hbm_to_smem %s0, 16, [#allocation3], [#allocation2]
  %9 = dma.done [#allocation2], 16
  %10 = sfence
  $region1: #{tpu_custom_call.1} parent=0
    #allocation4 [shape = 'u8[4096]{0}', space=vmem, size = 0x1000, scoped, tag = 'input window, operand 1, single buffered']
    #allocation5 [shape = 's32[1]{0}', space=sflag, size = 0x4, scoped, tag = 'scoped memory for tpu_custom_call.1']
    #allocation6 [shape = 's32[1]{0}', space=sflag, size = 0x4, scoped, tag = 'scoped memory for tpu_custom_call.1']
    #allocation7 [shape = 'u8[4096]{0}', space=vmem, size = 0x1000, scoped, tag = 'output window, operand 0, single buffered']
    %11 = vsyncpa [#allocation5], 0
    %12 = vsyncpa [#allocation6], 0
    // Predicated region
    $region2: #{tpu_custom_call.1} parent=1 // pred_check
      _
    $region3: #{tpu_custom_call.1} parent=1 // pred_check_branch
      %14 = sbr.rel (0) target = $region5
    $region4: #{tpu_custom_call.1} parent=1 // pred_region
      %s16 = ssub.s32 128, 128
      %17 = vsyncadd [#allocation5], %s16
      %s19 = sshll.u32 [#allocation4], 4
      %s20 = int_to_ptr.vmem [resolvable:$true] %s19
      %22 = dma.hbm_to_vmem [thread:$0]  %s1, 128, %s20, [#allocation5]
    $region5: #{tpu_custom_call.1} parent=1 // pred_fallthru
      _
    // Predicated region
    $region6: #{tpu_custom_call.1} parent=1 // pred_check
      _
    $region7: #{tpu_custom_call.1} parent=1 // pred_check_branch
      %24 = sbr.rel (0) target = $region9
    $region8: #{tpu_custom_call.1} parent=1 // pred_region
      %25 = dma.done [#allocation5], 128
    $region9: #{tpu_custom_call.1} parent=1 // pred_fallthru
      _
    %v26 = vld [vmem:[#allocation4] sm:$0xff]
    %s27 = sld [smem:[#allocation3]]
    %v28 = vstv %s27
    %v29 = vmul.f32 %v26, %v28
    %s30 = sld [smem:[#allocation3 + $0x3]]
    %v31 = vstv %s30
    %v32 = vadd.f32 %v29, %v31
    %v33 = vtanh.pop %v32
    %s34 = sld [smem:[#allocation3 + $0x1]]
    %v35 = vstv %s34
    %v36 = vmul.f32 %v26, %v35
    %s37 = sld [smem:[#allocation3 + $0x4]]
    %v38 = vstv %s37
    %v39 = vadd.f32 %v36, %v38
    %v40 = vtanh.pop %v39
    %s41 = sld [smem:[#allocation3 + $0x2]]
    %v42 = vstv %s41
    %v43 = vmul.f32 %v26, %v42
    %s44 = sld [smem:[#allocation3 + $0x5]]
    %v45 = vstv %s44
    %v46 = vadd.f32 %v43, %v45
    %v47 = vtanh.pop %v46
    %s48 = sld [smem:[#allocation3 + $0x6]]
    %v49 = vstv %s48
    %v50 = vmul.f32 %v33, %v49
    %s51 = sld [smem:[#allocation3 + $0x7]]
    %v52 = vstv %s51
    %v53 = vmul.f32 %v40, %v52
    %v54 = vadd.f32 %v50, %v53
    %s55 = sld [smem:[#allocation3 + $0x8]]
    %v56 = vstv %s55
    %v57 = vmul.f32 %v47, %v56
    %v58 = vadd.f32 %v54, %v57
    %s59 = sld [smem:[#allocation3 + $0x9]]
    %v60 = vstv %s59
    %v61 = vadd.f32 %v58, %v60
    %v62 = vtanh.pop %v61
    %v63 = vmul.f32 %v62, 0.5
    %v64 = vadd.f32 %v63, 0.5
    %65 = vst [vmem:[#allocation7] sm:$0xff] %v64
    // Predicated region
    $region10: #{tpu_custom_call.1} parent=1 // pred_check
      _
    $region11: #{tpu_custom_call.1} parent=1 // pred_check_branch
      %67 = sbr.rel (0) target = $region13
    $region12: #{tpu_custom_call.1} parent=1 // pred_region
      %s69 = ssub.s32 128, 128
      %70 = vsyncadd [#allocation6], %s69
      %s72 = sshll.u32 [#allocation7], 4
      %s73 = int_to_ptr.vmem [resolvable:$true] %s72
      %75 = dma.vmem_to_hbm [thread:$0]  %s73, 128, %s2, [#allocation6]
    $region13: #{tpu_custom_call.1} parent=1 // pred_fallthru
      _
    // Predicated region
    $region14: #{tpu_custom_call.1} parent=1 // pred_check
      _
    $region15: #{tpu_custom_call.1} parent=1 // pred_check_branch
      %77 = sbr.rel (0) target = $region17
    $region16: #{tpu_custom_call.1} parent=1 // pred_region
      %78 = dma.done [#allocation6], 128
    $region17: #{tpu_custom_call.1} parent=1 // pred_fallthru
      _
    %79 = vsyncpa [#allocation5], 1
    %80 = vsyncpa [#allocation6], 1

</llo_original>
